<compile_context>
chip_gen: v7x
topology: tpu7x:2x2x1
jax: 0.10.0
libtpu: 0.0.40
codegen_flags: <defaults>
</compile_context>

<pallas_src>
import functools
import math

import numpy as np
import jax
import jax.numpy as jnp
from jax import lax
from jax.experimental import pallas as pl
from jax.experimental.pallas import tpu as pltpu


_VMEM_LIMIT_BYTES = 48 * 1024 * 1024   # sized for v7x's 64 MiB physical VMEM
_TN_MAX = 2048                         # output-length tile (multiple of 128)
_SINC_TAP_CHUNK = 32                   # tap-chunk for the Cin=1 (sinc) conv


def _round_up(a, b):
    return (a + b - 1) // b * b


def _tile_len(l_out):
    """Pick output-length tile tn (multiple of 8) and number of tiles."""
    if l_out <= _TN_MAX:
        return _round_up(l_out, 8), 1
    return _TN_MAX, pl.cdiv(l_out, _TN_MAX)


# ----------------------------------------------------------------------------
# Kernel 1: direct Conv1d (stride 1) in NLC layout, Cin >= 8.
# Fused: BatchNorm (eval, folded to scale/shift), ReLU, optional MaxPool1d(4).
# Reduction over taps runs in-kernel over shifted slices of the VMEM-resident
# input -- no im2col in HBM.
# ----------------------------------------------------------------------------
def _conv_nlc_kernel(x_ref, w_ref, scale_ref, shift_ref, o_ref, acc_ref,
                     *, K, tn, relu, pool):
    # x_ref:(Lp, Cin) bf16 | w_ref:(K, Cin, Cout) bf16 | acc_ref:(tn, Cout) f32
    j = pl.program_id(1)
    base = j * tn
    acc_ref[...] = jnp.zeros_like(acc_ref)

    def tap(k, carry):
        xs = x_ref[pl.ds(base + k, tn), :]                     # (tn, Cin)
        acc_ref[...] += jnp.dot(xs, w_ref[k],
                                preferred_element_type=jnp.float32)
        return carry

    lax.fori_loop(0, K, tap, 0, unroll=(K <= 16))

    y = acc_ref[...] * scale_ref[...] + shift_ref[...]         # (tn, Cout)
    if relu:
        y = jnp.maximum(y, 0.0)
    if pool:
        # fused MaxPool1d(4): leading-dim split is layout preserving (length
        # lives on sublanes in NLC layout), then reduce the window axis.
        cout = acc_ref.shape[-1]
        y = jnp.max(y.reshape(tn // 4, 4, cout), axis=1)       # (tn//4, Cout)
    o_ref[...] = y.astype(o_ref.dtype)


def conv1d_bn_relu_nlc(x, w, scale, shift, *, padding=0, relu=True, pool=False):
    """(B, Lin, Cin) -> (B, Lout[/4], Cout): Conv1d(stride 1)+BN+ReLU[+MaxPool4]."""
    B, Lin, Cin = x.shape
    Cout, Cin2, K = w.shape
    assert Cin == Cin2
    Lout = Lin + 2 * padding - K + 1
    assert Lout >= (4 if pool else 1)

    tn, n_tiles = _tile_len(Lout)
    l_pad = n_tiles * tn
    tn_out = tn // 4 if pool else tn
    out_l = l_pad // 4 if pool else l_pad
    l_final = Lout // 4 if pool else Lout

    lp = l_pad + K - 1                              # padded input length
    extra = lp - (Lin + 2 * padding)
    xb = jnp.pad(x.astype(jnp.bfloat16),
                 ((0, 0), (padding, padding + extra), (0, 0)))

    w_t = jnp.transpose(w, (2, 1, 0)).astype(jnp.bfloat16)     # (K, Cin, Cout)
    scale2 = scale.reshape(1, Cout).astype(jnp.float32)
    shift2 = shift.reshape(1, Cout).astype(jnp.float32)

    kernel = functools.partial(_conv_nlc_kernel, K=K, tn=tn, relu=relu, pool=pool)
    out = pl.pallas_call(
        kernel,
        out_shape=jax.ShapeDtypeStruct((B, out_l, Cout), jnp.float32),
        grid_spec=pltpu.PrefetchScalarGridSpec(
            num_scalar_prefetch=0,
            grid=(B, n_tiles),
            in_specs=[
                pl.BlockSpec((None, lp, Cin), lambda b, j: (b, 0, 0)),
                pl.BlockSpec((K, Cin, Cout), lambda b, j: (0, 0, 0)),
                pl.BlockSpec((1, Cout), lambda b, j: (0, 0)),
                pl.BlockSpec((1, Cout), lambda b, j: (0, 0)),
            ],
            out_specs=pl.BlockSpec((None, tn_out, Cout), lambda b, j: (b, j, 0)),
            scratch_shapes=[pltpu.VMEM((tn, Cout), jnp.float32)],
        ),
        compiler_params=pltpu.CompilerParams(
            dimension_semantics=("parallel", "parallel"),
            vmem_limit_bytes=_VMEM_LIMIT_BYTES),
    )(xb, w_t, scale2, shift2)

    return out if out_l == l_final else out[:, :l_final, :]


# ----------------------------------------------------------------------------
# Kernel 2: SincConv (Cin == 1) + BN + ReLU, NCL output.
# In-VMEM im2col of tap chunks (patch scratch), MXU dot per chunk.
# ----------------------------------------------------------------------------
def _sinc_conv_kernel(x_ref, w_ref, scale_ref, shift_ref, o_ref,
                      acc_ref, patch_ref, *, K_pad, tn, relu):
    # x_ref:(1, Lp) bf16 | w_ref:(Cout, K_pad) bf16 | acc_ref:(Cout, tn) f32
    j = pl.program_id(1)
    base = j * tn
    acc_ref[...] = jnp.zeros_like(acc_ref)

    KC = patch_ref.shape[0]
    for c in range(K_pad // KC):                    # static unroll over chunks
        for t in range(KC):                         # in-VMEM im2col of a chunk
            patch_ref[pl.ds(t, 1), :] = x_ref[:, pl.ds(base + c * KC + t, tn)]
        acc_ref[...] += jnp.dot(w_ref[:, c * KC:(c + 1) * KC], patch_ref[...],
                                preferred_element_type=jnp.float32)

    y = acc_ref[...] * scale_ref[...] + shift_ref[...]
    if relu:
        y = jnp.maximum(y, 0.0)
    o_ref[...] = y.astype(o_ref.dtype)


def sinc_conv_bn_relu(x, filters, scale, shift, *, relu=True):
    """(B, 1, Lin) -> (B, Cout, Lout) NCL; SincConv (padding 0) + BN + ReLU."""
    B, Cin, Lin = x.shape
    assert Cin == 1
    Cout, _, K = filters.shape
    Lout = Lin - K + 1
    K_pad = _round_up(K, _SINC_TAP_CHUNK)

    tn, n_tiles = _tile_len(Lout)
    l_pad = n_tiles * tn
    lp = l_pad + K_pad - 1
    xb = jnp.pad(x.astype(jnp.bfloat16), ((0, 0), (0, 0), (0, lp - Lin)))

    w2 = jnp.pad(filters.reshape(Cout, K), ((0, 0), (0, K_pad - K)))
    w2 = w2.astype(jnp.bfloat16)
    scale2 = scale.reshape(Cout, 1).astype(jnp.float32)
    shift2 = shift.reshape(Cout, 1).astype(jnp.float32)

    kernel = functools.partial(_sinc_conv_kernel, K_pad=K_pad, tn=tn, relu=relu)
    out = pl.pallas_call(
        kernel,
        out_shape=jax.ShapeDtypeStruct((B, Cout, l_pad), jnp.float32),
        grid_spec=pltpu.PrefetchScalarGridSpec(
            num_scalar_prefetch=0,
            grid=(B, n_tiles),
            in_specs=[
                pl.BlockSpec((None, 1, lp), lambda b, j: (b, 0, 0)),
                pl.BlockSpec((Cout, K_pad), lambda b, j: (0, 0)),
                pl.BlockSpec((Cout, 1), lambda b, j: (0, 0)),
                pl.BlockSpec((Cout, 1), lambda b, j: (0, 0)),
            ],
            out_specs=pl.BlockSpec((None, Cout, tn), lambda b, j: (b, 0, j)),
            scratch_shapes=[pltpu.VMEM((Cout, tn), jnp.float32),
                            pltpu.VMEM((_SINC_TAP_CHUNK, tn), jnp.bfloat16)],
        ),
        compiler_params=pltpu.CompilerParams(
            dimension_semantics=("parallel", "parallel"),
            vmem_limit_bytes=_VMEM_LIMIT_BYTES),
    )(xb, w2, scale2, shift2)

    return out if l_pad == Lout else out[:, :, :Lout]


def maxpool4_ncl_to_nlc(x):
    # TODO(synk): pool of the sinc stage stays in XLA (lane-axis pooling); all
    # later MaxPool1d(4) layers are fused into the conv kernel epilogue.
    B, C, L = x.shape
    lo = L // 4
    x = jnp.max(x[:, :, :lo * 4].reshape(B, C, lo, 4), axis=-1)
    return jnp.transpose(x, (0, 2, 1))              # NCL -> NLC


# ----------------------------------------------------------------------------
# Kernel 3: Adaptive_Spectral_Block frequency-domain math
# (complex weighting, per-row energy, adaptive sigmoid mask, high-freq path)
# ----------------------------------------------------------------------------
def _asb_kernel(xr_ref, xi_ref, wr_ref, wi_ref, whr_ref, whi_ref,
                thr_ref, smooth_ref, yr_ref, yi_ref):
    xr = xr_ref[...]
    xi = xi_ref[...]
    # energy = sum_f |X|^2 per (batch, channel) row.
    energy = jnp.sum(xr * xr + xi * xi, axis=-1, keepdims=True)
    # torch.median over the channel dim; the model feeds a single channel, so
    # the median equals the energy itself.
    norm_e = energy / (energy + 1e-6)
    mask = jax.nn.sigmoid((norm_e - thr_ref[0]) * smooth_ref[0])

    wr, wi = wr_ref[...], wi_ref[...]
    whr, whi = whr_ref[...], whi_ref[...]

    # x_weighted = x_fft * weight ; += (x_fft * mask) * weight_high
    yr = xr * wr - xi * wi
    yi = xr * wi + xi * wr
    mr = xr * mask
    mi = xi * mask
    yr_ref[...] = yr + (mr * whr - mi * whi)
    yi_ref[...] = yi + (mr * whi + mi * whr)


def adaptive_spectral_block(x, p):
    B, C, L = x.shape
    dtype = x.dtype
    xf = jnp.fft.rfft(x.astype(jnp.float32), axis=-1, norm="ortho")
    # TODO(synk): rfft/irfft have no Pallas primitive; they stay in XLA.
    F = xf.shape[-1]
    xr = jnp.real(xf).reshape(B * C, F).astype(jnp.float32)
    xi = jnp.imag(xf).reshape(B * C, F).astype(jnp.float32)

    wr = p["complex_weight"][:, 0].reshape(1, F)
    wi = p["complex_weight"][:, 1].reshape(1, F)
    whr = p["complex_weight_high"][:, 0].reshape(1, F)
    whi = p["complex_weight_high"][:, 1].reshape(1, F)

    def vspec(shape):
        return pl.BlockSpec(shape, lambda i: (0, 0))

    yr, yi = pl.pallas_call(
        _asb_kernel,
        out_shape=(jax.ShapeDtypeStruct((B * C, F), jnp.float32),
                   jax.ShapeDtypeStruct((B * C, F), jnp.float32)),
        grid_spec=pltpu.PrefetchScalarGridSpec(
            num_scalar_prefetch=0,
            grid=(1,),
            in_specs=[
                vspec((B * C, F)), vspec((B * C, F)),
                vspec((1, F)), vspec((1, F)),
                vspec((1, F)), vspec((1, F)),
                pl.BlockSpec(memory_space=pltpu.MemorySpace.SMEM),
                pl.BlockSpec(memory_space=pltpu.MemorySpace.SMEM),
            ],
            out_specs=(vspec((B * C, F)), vspec((B * C, F))),
        ),
    )(xr, xi, wr, wi, whr, whi, p["threshold_param"], p["smooth_param"])

    yf = (yr + 1j * yi).reshape(B, C, F)
    y = jnp.fft.irfft(yf, n=L, axis=-1, norm="ortho")
    return y.astype(dtype)


# ----------------------------------------------------------------------------
# SincConv parameter construction (identical math to the PyTorch __init__)
# ----------------------------------------------------------------------------
def make_sinc_params(out_channels=64, kernel_size=251, sample_rate=16000,
                     min_low_hz=50, min_band_hz=50):
    if kernel_size % 2 == 0:
        kernel_size += 1

    def to_mel(f, beta=1.5):
        return 2595 * np.log10(1 + beta * (f / 700))

    def to_hz(m, beta):
        return 700 / beta * (10 ** (m / 2595) - 1)

    def hz_to_imel(hz):
        return 2195.286 - 2595 * np.log10(1 + (8031.25 - hz) / 700)

    def imel_to_hz(im):
        return 8031.25 - 700 * (10 ** ((2195.286 - im) / 2595) - 1)

    low_hz = 30
    high_hz = sample_rate / 2 - (min_low_hz + min_band_hz)
    f_split = sample_rate / 4 - (min_low_hz + min_band_hz)
    n_mels_half = out_channels // 2

    mel_points = np.linspace(to_mel(low_hz, 1.5), to_mel(f_split, 1.5), n_mels_half + 1)
    hz_points_mel = to_hz(mel_points, 1.5)
    imel_points = np.linspace(hz_to_imel(f_split), hz_to_imel(high_hz), n_mels_half + 1)
    hz_points_imel = imel_to_hz(imel_points)
    hz = np.concatenate((hz_points_mel, hz_points_imel[1:]))

    low_hz_ = hz[:-1].reshape(-1, 1).astype(np.float32)
    band_hz_ = np.diff(hz).reshape(-1, 1).astype(np.float32)

    n_lin = np.linspace(0, kernel_size / 2 - 1, num=int(kernel_size / 2))
    window_ = (0.54 - 0.46 * np.cos(2 * math.pi * n_lin / kernel_size)).astype(np.float32)
    n = (kernel_size - 1) / 2.0
    n_ = (2 * math.pi * np.arange(-n, 0).reshape(1, -1) / sample_rate).astype(np.float32)

    return dict(low_hz_=jnp.asarray(low_hz_), band_hz_=jnp.asarray(band_hz_),
                window_=jnp.asarray(window_), n_=jnp.asarray(n_),
                kernel_size=kernel_size, sample_rate=sample_rate,
                min_low_hz=min_low_hz, min_band_hz=min_band_hz,
                out_channels=out_channels)


def sinc_filters(sp):
    low = sp["min_low_hz"] + jnp.abs(sp["low_hz_"])
    high = jnp.clip(low + sp["min_band_hz"] + jnp.abs(sp["band_hz_"]),
                    sp["min_low_hz"], sp["sample_rate"] / 2)
    band = (high - low)[:, 0]
    n_ = sp["n_"]
    f_low = low @ n_
    f_high = high @ n_
    bp_left = (jnp.sin(f_high) - jnp.sin(f_low)) / (n_ / 2) * sp["window_"]
    bp_center = 2 * band.reshape(-1, 1)
    bp_right = jnp.flip(bp_left, axis=1)
    bp = jnp.concatenate([bp_left, bp_center, bp_right], axis=1)
    bp = bp / (2 * band[:, None])
    return bp.reshape(sp["out_channels"], 1, sp["kernel_size"])


# ----------------------------------------------------------------------------
# Parameter init (deterministic, fresh-module style; BatchNorm in eval mode,
# folded into per-channel scale/shift together with the conv bias)
# ----------------------------------------------------------------------------
def init_params(key, L, dim=64, num_classes=5, sample_rate=16000):
    ks = jax.random.split(key, 32)
    it = iter(range(32))
    nk = lambda: ks[next(it)]
    F = L // 2 + 1
    eps = 1e-5

    def bn_fold(k, C):
        k1, k2 = jax.random.split(k)
        gamma = 1.0 + 0.1 * jax.random.normal(k1, (C,), jnp.float32)
        beta = 0.1 * jax.random.normal(k2, (C,), jnp.float32)
        mean = jnp.zeros((C,), jnp.float32)
        var = jnp.ones((C,), jnp.float32)
        scale = gamma / jnp.sqrt(var + eps)
        return scale, beta - mean * scale

    def conv_bn(kc, Cout, Cin, K):
        kw, kb, kbn = jax.random.split(kc, 3)
        w = 0.05 * jax.random.normal(kw, (Cout, Cin, K), jnp.float32)
        b = 0.05 * jax.random.normal(kb, (Cout,), jnp.float32)
        scale, shift0 = bn_fold(kbn, Cout)
        return w, scale, shift0 + b * scale

    params = {}
    params["asb"] = dict(
        complex_weight=0.02 * jax.random.normal(nk(), (F, 2), jnp.float32),
        complex_weight_high=0.02 * jax.random.normal(nk(), (F, 2), jnp.float32),
        threshold_param=jax.random.uniform(nk(), (1,), jnp.float32),
        smooth_param=jax.random.uniform(nk(), (1,), jnp.float32),
    )
    params["sinc"] = make_sinc_params(out_channels=dim, kernel_size=251,
                                      sample_rate=sample_rate, min_low_hz=50,
                                      min_band_hz=50)
    params["bn1_scale"], params["bn1_shift"] = bn_fold(nk(), 64)
    params["conv2a_w"], params["conv2a_scale"], params["conv2a_shift"] = conv_bn(nk(), 64, 64, 11)
    params["conv2b_w"], params["conv2b_scale"], params["conv2b_shift"] = conv_bn(nk(), 64, 64, 3)
    params["conv3a_w"], params["conv3a_scale"], params["conv3a_shift"] = conv_bn(nk(), 128, 64, 51)
    params["conv3b_w"], params["conv3b_scale"], params["conv3b_shift"] = conv_bn(nk(), 128, 128, 51)
    params["conv4a_w"], params["conv4a_scale"], params["conv4a_shift"] = conv_bn(nk(), 256, 128, 101)
    params["conv4b_w"], params["conv4b_scale"], params["conv4b_shift"] = conv_bn(nk(), 256, 256, 101)
    params["fc1_w"] = 0.05 * jax.random.normal(nk(), (num_classes, 256), jnp.float32)
    params["fc1_b"] = 0.05 * jax.random.normal(nk(), (num_classes,), jnp.float32)
    return params


# ----------------------------------------------------------------------------
# model_classification.forward
# ----------------------------------------------------------------------------
def model_forward(params, x):
    # x: (B, 1, L) float32  (NCL, same as PyTorch)
    x = adaptive_spectral_block(x, params["asb"])

    # ---- mul_block --------------------------------------------------------
    filters = sinc_filters(params["sinc"])                      # (64, 1, 251)
    x = sinc_conv_bn_relu(x, filters, params["bn1_scale"],
                          params["bn1_shift"])                  # sin_conv1+bn1+relu
    x = maxpool4_ncl_to_nlc(x)                                  # pool1 -> (B, L1, 64)

    x = conv1d_bn_relu_nlc(x, params["conv2a_w"], params["conv2a_scale"],
                           params["conv2a_shift"], padding=5)
    x = conv1d_bn_relu_nlc(x, params["conv2b_w"], params["conv2b_scale"],
                           params["conv2b_shift"], padding=0, pool=True)   # pool2

    x = conv1d_bn_relu_nlc(x, params["conv3a_w"], params["conv3a_scale"],
                           params["conv3a_shift"], padding=25)
    x = conv1d_bn_relu_nlc(x, params["conv3b_w"], params["conv3b_scale"],
                           params["conv3b_shift"], padding=25, pool=True)  # pool3

    x = conv1d_bn_relu_nlc(x, params["conv4a_w"], params["conv4a_scale"],
                           params["conv4a_shift"], padding=50)
    x = conv1d_bn_relu_nlc(x, params["conv4b_w"], params["conv4b_scale"],
                           params["conv4b_shift"], padding=50, pool=True)  # pool4

    # AdaptiveAvgPool1d(1) + Flatten   (length is axis 1 in NLC layout)
    x = jnp.mean(x, axis=1)                                     # (B, 256)

    # fc1: tiny (5, 256) GEMV -- plain XLA, a Pallas call is pure overhead.
    return x @ params["fc1_w"].T + params["fc1_b"]              # (B, num_classes)


if __name__ == "__main__":
    key = jax.random.PRNGKey(0)
    kx, kp = jax.random.split(key)

    B, L = 2, 1024  # small L (instead of 16000) that still survives the conv/pool stack
    params = init_params(kp, L=L, dim=64, num_classes=5, sample_rate=16000)
    x = jax.random.normal(kx, (B, 1, L), jnp.float32)

    out = model_forward(params, x)
    out = jax.block_until_ready(out)
    assert out.shape == (B, 5) and out.dtype == jnp.float32
    print("KERNEL_OK")
</pallas_src>

<mosaic_0001>
module attributes {stable_mosaic.version = 11 : i64} {
  func.func @_asb_kernel(%arg0: i32, %arg1: memref<2x513xf32, #tpu.memory_space<vmem>>, %arg2: memref<2x513xf32, #tpu.memory_space<vmem>>, %arg3: memref<1x513xf32, #tpu.memory_space<vmem>>, %arg4: memref<1x513xf32, #tpu.memory_space<vmem>>, %arg5: memref<1x513xf32, #tpu.memory_space<vmem>>, %arg6: memref<1x513xf32, #tpu.memory_space<vmem>>, %arg7: memref<1xf32, #tpu.memory_space<smem>>, %arg8: memref<1xf32, #tpu.memory_space<smem>>, %arg9: memref<2x513xf32, #tpu.memory_space<vmem>>, %arg10: memref<2x513xf32, #tpu.memory_space<vmem>>) attributes {dimension_semantics = [#tpu.dimension_semantics<arbitrary>], iteration_bounds = array<i64: 1>, scalar_prefetch = 0 : i64, scratch_operands = 0 : i64, tpu.core_type = #tpu.core_type<tc>, window_params = [{pipeline_mode = #tpu.pipeline_mode<synchronous>, transform_indices = @transform_0, window_bounds = array<i64: 2, 513>}, {pipeline_mode = #tpu.pipeline_mode<synchronous>, transform_indices = @transform_1, window_bounds = array<i64: 2, 513>}, {pipeline_mode = #tpu.pipeline_mode<synchronous>, transform_indices = @transform_2, window_bounds = array<i64: 1, 513>}, {pipeline_mode = #tpu.pipeline_mode<synchronous>, transform_indices = @transform_3, window_bounds = array<i64: 1, 513>}, {pipeline_mode = #tpu.pipeline_mode<synchronous>, transform_indices = @transform_4, window_bounds = array<i64: 1, 513>}, {pipeline_mode = #tpu.pipeline_mode<synchronous>, transform_indices = @transform_5, window_bounds = array<i64: 1, 513>}, {transform_indices = @transform_6, window_bounds = array<i64: 1>}, {transform_indices = @transform_7, window_bounds = array<i64: 1>}, {pipeline_mode = #tpu.pipeline_mode<synchronous>, transform_indices = @transform_8, window_bounds = array<i64: 2, 513>}, {pipeline_mode = #tpu.pipeline_mode<synchronous>, transform_indices = @transform_9, window_bounds = array<i64: 2, 513>}]} {
    %c0 = arith.constant 0 : index
    %c0_0 = arith.constant 0 : index
    %0 = vector.load %arg1[%c0, %c0_0] : memref<2x513xf32, #tpu.memory_space<vmem>>, vector<2x513xf32>
    %c0_1 = arith.constant 0 : index
    %c0_2 = arith.constant 0 : index
    %1 = vector.load %arg2[%c0_1, %c0_2] : memref<2x513xf32, #tpu.memory_space<vmem>>, vector<2x513xf32>
    %2 = arith.mulf %0, %0 : vector<2x513xf32>
    %3 = arith.mulf %1, %1 : vector<2x513xf32>
    %4 = arith.addf %2, %3 : vector<2x513xf32>
    %cst = arith.constant dense<0.000000e+00> : vector<2xf32>
    %5 = vector.multi_reduction <add>, %4, %cst [1] : vector<2x513xf32> to vector<2xf32>
    %6 = vector.shape_cast %5 : vector<2xf32> to vector<2x1xf32>
    %cst_3 = arith.constant 9.99999997E-7 : f32
    %7 = vector.broadcast %cst_3 : f32 to vector<2x1xf32>
    %8 = arith.addf %6, %7 : vector<2x1xf32>
    %9 = arith.divf %6, %8 : vector<2x1xf32>
    %c0_4 = arith.constant 0 : index
    %10 = memref.load %arg7[%c0_4] : memref<1xf32, #tpu.memory_space<smem>>
    %11 = vector.broadcast %10 : f32 to vector<2x1xf32>
    %12 = arith.subf %9, %11 : vector<2x1xf32>
    %c0_5 = arith.constant 0 : index
    %13 = memref.load %arg8[%c0_5] : memref<1xf32, #tpu.memory_space<smem>>
    %14 = vector.broadcast %13 : f32 to vector<2x1xf32>
    %15 = arith.mulf %12, %14 : vector<2x1xf32>
    %16 = arith.negf %15 : vector<2x1xf32>
    %17 = math.exp %16 : vector<2x1xf32>
    %cst_6 = arith.constant 1.000000e+00 : f32
    %18 = vector.broadcast %cst_6 : f32 to vector<2x1xf32>
    %19 = arith.addf %18, %17 : vector<2x1xf32>
    %20 = arith.divf %18, %19 : vector<2x1xf32>
    %c0_7 = arith.constant 0 : index
    %c0_8 = arith.constant 0 : index
    %21 = vector.load %arg3[%c0_7, %c0_8] : memref<1x513xf32, #tpu.memory_space<vmem>>, vector<1x513xf32>
    %c0_9 = arith.constant 0 : index
    %c0_10 = arith.constant 0 : index
    %22 = vector.load %arg4[%c0_9, %c0_10] : memref<1x513xf32, #tpu.memory_space<vmem>>, vector<1x513xf32>
    %c0_11 = arith.constant 0 : index
    %c0_12 = arith.constant 0 : index
    %23 = vector.load %arg5[%c0_11, %c0_12] : memref<1x513xf32, #tpu.memory_space<vmem>>, vector<1x513xf32>
    %c0_13 = arith.constant 0 : index
    %c0_14 = arith.constant 0 : index
    %24 = vector.load %arg6[%c0_13, %c0_14] : memref<1x513xf32, #tpu.memory_space<vmem>>, vector<1x513xf32>
    %25 = vector.broadcast %21 : vector<1x513xf32> to vector<2x513xf32>
    %26 = arith.mulf %0, %25 : vector<2x513xf32>
    %27 = vector.broadcast %22 : vector<1x513xf32> to vector<2x513xf32>
    %28 = arith.mulf %1, %27 : vector<2x513xf32>
    %29 = arith.subf %26, %28 : vector<2x513xf32>
    %30 = vector.broadcast %22 : vector<1x513xf32> to vector<2x513xf32>
    %31 = arith.mulf %0, %30 : vector<2x513xf32>
    %32 = vector.broadcast %21 : vector<1x513xf32> to vector<2x513xf32>
    %33 = arith.mulf %1, %32 : vector<2x513xf32>
    %34 = arith.addf %31, %33 : vector<2x513xf32>
    %35 = vector.broadcast %20 : vector<2x1xf32> to vector<2x513xf32>
    %36 = arith.mulf %0, %35 : vector<2x513xf32>
    %37 = vector.broadcast %20 : vector<2x1xf32> to vector<2x513xf32>
    %38 = arith.mulf %1, %37 : vector<2x513xf32>
    %39 = vector.broadcast %23 : vector<1x513xf32> to vector<2x513xf32>
    %40 = arith.mulf %36, %39 : vector<2x513xf32>
    %41 = vector.broadcast %24 : vector<1x513xf32> to vector<2x513xf32>
    %42 = arith.mulf %38, %41 : vector<2x513xf32>
    %43 = arith.subf %40, %42 : vector<2x513xf32>
    %44 = arith.addf %29, %43 : vector<2x513xf32>
    %c0_15 = arith.constant 0 : index
    %c0_16 = arith.constant 0 : index
    %45 = vector.load %arg9[%c0_15, %c0_16] : memref<2x513xf32, #tpu.memory_space<vmem>>, vector<2x513xf32>
    tpu.vector_store %arg9[%c0_15, %c0_16], %44 {strides = array<i32>} : memref<2x513xf32, #tpu.memory_space<vmem>>, vector<2x513xf32>,
    %46 = vector.broadcast %24 : vector<1x513xf32> to vector<2x513xf32>
    %47 = arith.mulf %36, %46 : vector<2x513xf32>
    %48 = vector.broadcast %23 : vector<1x513xf32> to vector<2x513xf32>
    %49 = arith.mulf %38, %48 : vector<2x513xf32>
    %50 = arith.addf %47, %49 : vector<2x513xf32>
    %51 = arith.addf %34, %50 : vector<2x513xf32>
    %c0_17 = arith.constant 0 : index
    %c0_18 = arith.constant 0 : index
    %52 = vector.load %arg10[%c0_17, %c0_18] : memref<2x513xf32, #tpu.memory_space<vmem>>, vector<2x513xf32>
    tpu.vector_store %arg10[%c0_17, %c0_18], %51 {strides = array<i32>} : memref<2x513xf32, #tpu.memory_space<vmem>>, vector<2x513xf32>,
    return
  }
  func.func @transform_0(%arg0: i32) -> (i32, i32) {
    %c0_i32 = arith.constant 0 : i32
    %c0_i32_0 = arith.constant 0 : i32
    %c0_i32_1 = arith.constant 0 : i32
    return %c0_i32, %c0_i32_0 : i32, i32
  }
  func.func @transform_1(%arg0: i32) -> (i32, i32) {
    %c0_i32 = arith.constant 0 : i32
    %c0_i32_0 = arith.constant 0 : i32
    %c0_i32_1 = arith.constant 0 : i32
    return %c0_i32, %c0_i32_0 : i32, i32
  }
  func.func @transform_2(%arg0: i32) -> (i32, i32) {
    %c0_i32 = arith.constant 0 : i32
    %c0_i32_0 = arith.constant 0 : i32
    %c0_i32_1 = arith.constant 0 : i32
    return %c0_i32, %c0_i32_0 : i32, i32
  }
  func.func @transform_3(%arg0: i32) -> (i32, i32) {
    %c0_i32 = arith.constant 0 : i32
    %c0_i32_0 = arith.constant 0 : i32
    %c0_i32_1 = arith.constant 0 : i32
    return %c0_i32, %c0_i32_0 : i32, i32
  }
  func.func @transform_4(%arg0: i32) -> (i32, i32) {
    %c0_i32 = arith.constant 0 : i32
    %c0_i32_0 = arith.constant 0 : i32
    %c0_i32_1 = arith.constant 0 : i32
    return %c0_i32, %c0_i32_0 : i32, i32
  }
  func.func @transform_5(%arg0: i32) -> (i32, i32) {
    %c0_i32 = arith.constant 0 : i32
    %c0_i32_0 = arith.constant 0 : i32
    %c0_i32_1 = arith.constant 0 : i32
    return %c0_i32, %c0_i32_0 : i32, i32
  }
  func.func @transform_6(%arg0: i32) -> i32 {
    %c0_i32 = arith.constant 0 : i32
    %c0_i32_0 = arith.constant 0 : i32
    return %c0_i32 : i32
  }
  func.func @transform_7(%arg0: i32) -> i32 {
    %c0_i32 = arith.constant 0 : i32
    %c0_i32_0 = arith.constant 0 : i32
    return %c0_i32 : i32
  }
  func.func @transform_8(%arg0: i32) -> (i32, i32) {
    %c0_i32 = arith.constant 0 : i32
    %c0_i32_0 = arith.constant 0 : i32
    %c0_i32_1 = arith.constant 0 : i32
    return %c0_i32, %c0_i32_0 : i32, i32
  }
  func.func @transform_9(%arg0: i32) -> (i32, i32) {
    %c0_i32 = arith.constant 0 : i32
    %c0_i32_0 = arith.constant 0 : i32
    %c0_i32_1 = arith.constant 0 : i32
    return %c0_i32, %c0_i32_0 : i32, i32
  }
}

</mosaic_0001>

<llo_original>
// kernel: tpu_custom_call.1
$region0: #{tpu_custom_call.1}
  #allocation0 [shape = 'u32[]', space=smem, size = 0x4, offset = 0x4, fixed_abs, tag = 'smem constant byte address 0x4 - core index']
  #allocation1 [shape = 'u32[144,128]{1,0:T(1,128)}', space=vmem, size = 0x12000, scoped, tag = 'internal scratch']
  #allocation2 [shape = 'f32[1]{0:T(128)S(6)}', space=smem, size = 0x200, scoped, tag = 'scoped memory for tpu_custom_call.1']
  #allocation3 [shape = 'f32[1]{0:T(128)S(6)}', space=smem, size = 0x200, scoped, tag = 'scoped memory for tpu_custom_call.1']
  %s0 = inlined_call_operand.hbm [shape: f32[2,513], index: 0, kind: input, shape index: {}]
  %s1 = inlined_call_operand.vmem [shape: f32[2,513], index: 1, kind: input, shape index: {}]
  %s2 = inlined_call_operand.vmem [shape: f32[1,513], index: 2, kind: input, shape index: {}]
  %s3 = inlined_call_operand.hbm [shape: f32[1,513], index: 3, kind: input, shape index: {}]
  %s4 = inlined_call_operand.vmem [shape: f32[1,513], index: 4, kind: input, shape index: {}]
  %s5 = inlined_call_operand.vmem [shape: f32[1,513], index: 5, kind: input, shape index: {}]
  %s6 = inlined_call_operand.<no memory space> [shape: f32[1], index: 6, kind: input, shape index: {}]
  %s7 = inlined_call_operand.<no memory space> [shape: f32[1], index: 7, kind: input, shape index: {}]
  %s8 = inlined_call_operand.hbm [shape: f32[2,513], index: 8, kind: output, shape index: {0}]
  %s9 = inlined_call_operand.hbm [shape: f32[2,513], index: 9, kind: output, shape index: {1}]
  %10 = xla_tuple %s8, %s9
  %s11 = sld [smem:[#allocation0]]
  $region58: #{tpu_custom_call.1} parent=0
    _
  %s13 = ssub.s32 1, %s11
  %s14 = scalar_select 0, %s13, %s11
  %15 = sst [smem:[#allocation2]] %s6
  %16 = sst [smem:[#allocation3]] %s7
  $region1: #{tpu_custom_call.1} parent=0
    #allocation4 [shape = 'u8[5120]{0}', space=vmem, size = 0x1400, scoped, tag = 'input window, operand 0, single buffered']
    #allocation5 [shape = 's32[1]{0}', space=sflag, size = 0x4, scoped, tag = 'scoped memory for tpu_custom_call.1']
    #allocation6 [shape = 's32[1]{0}', space=sflag, size = 0x4, scoped, tag = 'scoped memory for tpu_custom_call.1']
    #allocation7 [shape = 'u8[2560]{0}', space=vmem, size = 0xc00, scoped, tag = 'input window, operand 3, single buffered']
    #allocation8 [shape = 's32[1]{0}', space=sflag, size = 0x4, scoped, tag = 'scoped memory for tpu_custom_call.1']
    #allocation9 [shape = 'u8[5120]{0}', space=vmem, size = 0x1400, scoped, tag = 'output window, operand 0, single buffered']
    #allocation10 [shape = 'u8[5120]{0}', space=vmem, size = 0x1400, scoped, tag = 'output window, operand 1, single buffered']
    #allocation11 [shape = 's32[1]{0}', space=sflag, size = 0x4, scoped, tag = 'scoped memory for tpu_custom_call.1']
    %17 = vsyncpa [#allocation5], 0
    %18 = vsyncpa [#allocation8], 0
    %19 = vsyncpa [#allocation6], 0
    %20 = vsyncpa [#allocation11], 0
    // Predicated region
    $region2: #{tpu_custom_call.1} parent=1 // pred_check
      _
    $region3: #{tpu_custom_call.1} parent=1 // pred_check_branch
      %22 = sbr.rel (0) target = $region5
    $region4: #{tpu_custom_call.1} parent=1 // pred_region
      %s24 = ssub.s32 160, 160
      %25 = vsyncadd [#allocation5], %s24
      %s27 = sshll.u32 [#allocation4], 4
      %s28 = int_to_ptr.vmem [resolvable:$true] %s27
      %30 = dma.hbm_to_vmem [thread:$0]  %s0, 160, %s28, [#allocation5]
    $region5: #{tpu_custom_call.1} parent=1 // pred_fallthru
      _
    // Predicated region
    $region6: #{tpu_custom_call.1} parent=1 // pred_check
      _
    $region7: #{tpu_custom_call.1} parent=1 // pred_check_branch
      %32 = sbr.rel (0) target = $region9
    $region8: #{tpu_custom_call.1} parent=1 // pred_region
      _
    $region9: #{tpu_custom_call.1} parent=1 // pred_fallthru
      _
    // Predicated region
    $region10: #{tpu_custom_call.1} parent=1 // pred_check
      _
    $region11: #{tpu_custom_call.1} parent=1 // pred_check_branch
      %34 = sbr.rel (0) target = $region13
    $region12: #{tpu_custom_call.1} parent=1 // pred_region
      _
    $region13: #{tpu_custom_call.1} parent=1 // pred_fallthru
      _
    // Predicated region
    $region14: #{tpu_custom_call.1} parent=1 // pred_check
      _
    $region15: #{tpu_custom_call.1} parent=1 // pred_check_branch
      %36 = sbr.rel (0) target = $region17
    $region16: #{tpu_custom_call.1} parent=1 // pred_region
      %s38 = ssub.s32 80, 80
      %39 = vsyncadd [#allocation8], %s38
      %s41 = sshll.u32 [#allocation7], 4
      %s42 = int_to_ptr.vmem [resolvable:$true] %s41
      %44 = dma.hbm_to_vmem [thread:$0]  %s3, 80, %s42, [#allocation8]
    $region17: #{tpu_custom_call.1} parent=1 // pred_fallthru
      _
    // Predicated region
    $region18: #{tpu_custom_call.1} parent=1 // pred_check
      _
    $region19: #{tpu_custom_call.1} parent=1 // pred_check_branch
      %46 = sbr.rel (0) target = $region21
    $region20: #{tpu_custom_call.1} parent=1 // pred_region
      _
    $region21: #{tpu_custom_call.1} parent=1 // pred_fallthru
      _
    // Predicated region
    $region22: #{tpu_custom_call.1} parent=1 // pred_check
      _
    $region23: #{tpu_custom_call.1} parent=1 // pred_check_branch
      %48 = sbr.rel (0) target = $region25
    $region24: #{tpu_custom_call.1} parent=1 // pred_region
      _
    $region25: #{tpu_custom_call.1} parent=1 // pred_fallthru
      _
    // Predicated region
    $region26: #{tpu_custom_call.1} parent=1 // pred_check
      _
    $region27: #{tpu_custom_call.1} parent=1 // pred_check_branch
      %50 = sbr.rel (0) target = $region29
    $region28: #{tpu_custom_call.1} parent=1 // pred_region
      _
    $region29: #{tpu_custom_call.1} parent=1 // pred_fallthru
      _
    // Predicated region
    $region30: #{tpu_custom_call.1} parent=1 // pred_check
      _
    $region31: #{tpu_custom_call.1} parent=1 // pred_check_branch
      %52 = sbr.rel (0) target = $region33
    $region32: #{tpu_custom_call.1} parent=1 // pred_region
      _
    $region33: #{tpu_custom_call.1} parent=1 // pred_fallthru
      _
    // Predicated region
    $region34: #{tpu_custom_call.1} parent=1 // pred_check
      _
    $region35: #{tpu_custom_call.1} parent=1 // pred_check_branch
      %54 = sbr.rel (0) target = $region37
    $region36: #{tpu_custom_call.1} parent=1 // pred_region
      %55 = dma.done [#allocation5], 160
    $region37: #{tpu_custom_call.1} parent=1 // pred_fallthru
      _
    // Predicated region
    $region38: #{tpu_custom_call.1} parent=1 // pred_check
      _
    $region39: #{tpu_custom_call.1} parent=1 // pred_check_branch
      %57 = sbr.rel (0) target = $region41
    $region40: #{tpu_custom_call.1} parent=1 // pred_region
      %58 = dma.done [#allocation8], 80
    $region41: #{tpu_custom_call.1} parent=1 // pred_fallthru
      _
    %v59 = vld [vmem:[#allocation4] sm:$0xff]
    %v60 = vld [vmem:[#allocation4 + $0x8] sm:$0x3]
    %v61 = vld [vmem:[%s1] sm:$0xff]
    %v62 = vld [vmem:[%s1 + $0x8] sm:$0x3]
    %v63 = vmul.f32 %v59, %v59
    %v64 = vmul.f32 %v60, %v60
    %v65 = vmul.f32 %v61, %v61
    %v66 = vmul.f32 %v62, %v62
    %v67 = vadd.f32 %v63, %v65
    %v68 = vadd.f32 %v64, %v66
    %v71 = vcombine.high %v67, %v67
    %v73 = vunpack.c.l.s4 1983009808
    %v74 = vunpack.c.0.s8 %v73
    %v75 = vlaneseq
    %v76 = vshrl.u32 %v75, 7
    %v77 = vsub.s32 %v74, %v76
    %v78 = vrot.slane %v67, %v77
    %v80 = vunpack.c.l.s4 1983009808
    %v81 = vunpack.c.0.s8 %v80
    %v82 = vlaneseq
    %v83 = vshrl.u32 %v82, 7
    %v84 = vsub.s32 %v81, %v83
    %v85 = vrot.slane %v71, %v84
    %v86 = vcombine.high %v78, %v78
    %v87 = vcombine.high %v85, %v85
    %v89 = vunpack.c.l.s4 1983009808
    %v90 = vunpack.c.0.s8 %v89
    %v91 = vlaneseq
    %v92 = vshrl.u32 %v91, 7
    %v93 = vsub.s32 %v90, %v92
    %v94 = vrot.slane %v68, %v93
    %vm100 = vcmask 1041408
    %v101 = vsel %vm100, %v78, 0.0
    %v102 = vsel %vm100, %v86, 0.0
    %v103 = vadd.f32 %v101, %v102
    %v104 = vsel %vm100, %v85, 0.0
    %v105 = vadd.f32 %v103, %v104
    %v106 = vsel %vm100, %v87, 0.0
    %v107 = vadd.f32 %v105, %v106
    %vm108 = vcmask 1024
    %v109 = vsel %vm108, %v94, 0.0
    %v110 = vadd.f32 %v107, %v109
    %111 = vadd.xlane.f32.xlu0 %v110
    %v112 = vpop.xlane.xlu0 %111
    %v113 = vadd.f32 %v112, 1e-06
    %v114 = vrcp.pop %v113
    %v115 = vmul.f32 %v112, %v114
    %s116 = sld [smem:[#allocation2]]
    %v117 = vstv %s116
    %v118 = vsub.f32 %v115, %v117
    %s119 = sld [smem:[#allocation3]]
    %v120 = vstv %s119
    %v121 = vmul.f32 %v118, %v120
    %v122 = vxor.u32 %v121, 2147483648
    %v123 = vmul.f32 %v122, 1.442695
    %v124 = vpow.pop %v123
    %v125 = vadd.f32 %v124, 1.0
    %v126 = vrcp.pop %v125
    %v127 = vmul.f32 1.0, %v126
    %v128 = vld [vmem:[%s2] sm:$0x1f]
    %v129 = vld [vmem:[#allocation7] sm:$0x1f]
    %v130 = vld [vmem:[%s4] sm:$0x1f]
    %v131 = vld [vmem:[%s5] sm:$0x1f]
    %v133 = vlaneseq
    %v134 = vshrl.u32 %v133, 7
    %v135 = vsub.s32 0, %v134
    %v136 = vrot.slane %v128, %v135
    %v137 = vlaneseq
    %v138 = vshrl.u32 %v137, 7
    %v139 = vsub.s32 1, %v138
    %v140 = vrot.slane %v128, %v139
    %v141 = vlaneseq
    %v142 = vshrl.u32 %v141, 7
    %v143 = vsub.s32 2, %v142
    %v144 = vrot.slane %v128, %v143
    %v145 = vlaneseq
    %v146 = vshrl.u32 %v145, 7
    %v147 = vsub.s32 3, %v146
    %v148 = vrot.slane %v128, %v147
    %v149 = vlaneseq
    %v150 = vshrl.u32 %v149, 7
    %v151 = vsub.s32 4, %v150
    %v152 = vrot.slane %v128, %v151
    %v153 = vcombine.low %v136, %v140
    %v154 = vcombine.low %v144, %v148
    %v156 = vunpack.c.l.s4 1983009808
    %v157 = vunpack.c.0.s8 %v156
    %v158 = vlaneseq
    %v159 = vshrl.u32 %v158, 7
    %v160 = vsub.s32 %v157, %v159
    %v161 = vrot.slane %v153, %v160
    %v163 = vunpack.c.l.s4 1983009808
    %v164 = vunpack.c.0.s8 %v163
    %v165 = vlaneseq
    %v166 = vshrl.u32 %v165, 7
    %v167 = vsub.s32 %v164, %v166
    %v168 = vrot.slane %v154, %v167
    %v169 = vcombine.low %v161, %v168
    %v171 = vunpack.c.l.s4 1983009808
    %v172 = vunpack.c.0.s8 %v171
    %v173 = vlaneseq
    %v174 = vshrl.u32 %v173, 7
    %v175 = vsub.s32 %v172, %v174
    %v176 = vrot.slane %v152, %v175
    %v179 = vmul.f32 %v59, %v169
    %v180 = vmul.f32 %v60, %v176
    %v182 = vlaneseq
    %v183 = vshrl.u32 %v182, 7
    %v184 = vsub.s32 0, %v183
    %v185 = vrot.slane %v129, %v184
    %v186 = vlaneseq
    %v187 = vshrl.u32 %v186, 7
    %v188 = vsub.s32 1, %v187
    %v189 = vrot.slane %v129, %v188
    %v190 = vlaneseq
    %v191 = vshrl.u32 %v190, 7
    %v192 = vsub.s32 2, %v191
    %v193 = vrot.slane %v129, %v192
    %v194 = vlaneseq
    %v195 = vshrl.u32 %v194, 7
    %v196 = vsub.s32 3, %v195
    %v197 = vrot.slane %v129, %v196
    %v198 = vlaneseq
    %v199 = vshrl.u32 %v198, 7
    %v200 = vsub.s32 4, %v199
    %v201 = vrot.slane %v129, %v200
    %v202 = vcombine.low %v185, %v189
    %v203 = vcombine.low %v193, %v197
    %v205 = vunpack.c.l.s4 1983009808
    %v206 = vunpack.c.0.s8 %v205
    %v207 = vlaneseq
    %v208 = vshrl.u32 %v207, 7
    %v209 = vsub.s32 %v206, %v208
    %v210 = vrot.slane %v202, %v209
    %v212 = vunpack.c.l.s4 1983009808
    %v213 = vunpack.c.0.s8 %v212
    %v214 = vlaneseq
    %v215 = vshrl.u32 %v214, 7
    %v216 = vsub.s32 %v213, %v215
    %v217 = vrot.slane %v203, %v216
    %v218 = vcombine.low %v210, %v217
    %v220 = vunpack.c.l.s4 1983009808
    %v221 = vunpack.c.0.s8 %v220
    %v222 = vlaneseq
    %v223 = vshrl.u32 %v222, 7
    %v224 = vsub.s32 %v221, %v223
    %v225 = vrot.slane %v201, %v224
    %v228 = vmul.f32 %v61, %v218
    %v229 = vmul.f32 %v62, %v225
    %v230 = vsub.f32 %v179, %v228
    %v231 = vsub.f32 %v180, %v229
    %v232 = vmul.f32 %v59, %v218
    %v233 = vmul.f32 %v60, %v225
    %v234 = vmul.f32 %v61, %v169
    %v235 = vmul.f32 %v62, %v176
    %v236 = vadd.f32 %v232, %v234
    %v237 = vadd.f32 %v233, %v235
    %v240 = vunpack.c.l.s4 269488144
    %v241 = vunpack.c.0.s8 %v240
    %v242 = vlaneseq
    %v243 = vshrl.u32 %v242, 7
    %v244 = vsub.s32 %v241, %v243
    %v245 = vrot.slane %v127, %v244
    %v247 = vmul.f32 %v59, %v245
    %v248 = vmul.f32 %v60, %v245
    %v249 = vmul.f32 %v61, %v245
    %v250 = vmul.f32 %v62, %v245
    %v252 = vlaneseq
    %v253 = vshrl.u32 %v252, 7
    %v254 = vsub.s32 0, %v253
    %v255 = vrot.slane %v130, %v254
    %v256 = vlaneseq
    %v257 = vshrl.u32 %v256, 7
    %v258 = vsub.s32 1, %v257
    %v259 = vrot.slane %v130, %v258
    %v260 = vlaneseq
    %v261 = vshrl.u32 %v260, 7
    %v262 = vsub.s32 2, %v261
    %v263 = vrot.slane %v130, %v262
    %v264 = vlaneseq
    %v265 = vshrl.u32 %v264, 7
    %v266 = vsub.s32 3, %v265
    %v267 = vrot.slane %v130, %v266
    %v268 = vlaneseq
    %v269 = vshrl.u32 %v268, 7
    %v270 = vsub.s32 4, %v269
    %v271 = vrot.slane %v130, %v270
    %v272 = vcombine.low %v255, %v259
    %v273 = vcombine.low %v263, %v267
    %v275 = vunpack.c.l.s4 1983009808
    %v276 = vunpack.c.0.s8 %v275
    %v277 = vlaneseq
    %v278 = vshrl.u32 %v277, 7
    %v279 = vsub.s32 %v276, %v278
    %v280 = vrot.slane %v272, %v279
    %v282 = vunpack.c.l.s4 1983009808
    %v283 = vunpack.c.0.s8 %v282
    %v284 = vlaneseq
    %v285 = vshrl.u32 %v284, 7
    %v286 = vsub.s32 %v283, %v285
    %v287 = vrot.slane %v273, %v286
    %v288 = vcombine.low %v280, %v287
    %v290 = vunpack.c.l.s4 1983009808
    %v291 = vunpack.c.0.s8 %v290
    %v292 = vlaneseq
    %v293 = vshrl.u32 %v292, 7
    %v294 = vsub.s32 %v291, %v293
    %v295 = vrot.slane %v271, %v294
    %v298 = vmul.f32 %v247, %v288
    %v299 = vmul.f32 %v248, %v295
    %v301 = vlaneseq
    %v302 = vshrl.u32 %v301, 7
    %v303 = vsub.s32 0, %v302
    %v304 = vrot.slane %v131, %v303
    %v305 = vlaneseq
    %v306 = vshrl.u32 %v305, 7
    %v307 = vsub.s32 1, %v306
    %v308 = vrot.slane %v131, %v307
    %v309 = vlaneseq
    %v310 = vshrl.u32 %v309, 7
    %v311 = vsub.s32 2, %v310
    %v312 = vrot.slane %v131, %v311
    %v313 = vlaneseq
    %v314 = vshrl.u32 %v313, 7
    %v315 = vsub.s32 3, %v314
    %v316 = vrot.slane %v131, %v315
    %v317 = vlaneseq
    %v318 = vshrl.u32 %v317, 7
    %v319 = vsub.s32 4, %v318
    %v320 = vrot.slane %v131, %v319
    %v321 = vcombine.low %v304, %v308
    %v322 = vcombine.low %v312, %v316
    %v324 = vunpack.c.l.s4 1983009808
    %v325 = vunpack.c.0.s8 %v324
    %v326 = vlaneseq
    %v327 = vshrl.u32 %v326, 7
    %v328 = vsub.s32 %v325, %v327
    %v329 = vrot.slane %v321, %v328
    %v331 = vunpack.c.l.s4 1983009808
    %v332 = vunpack.c.0.s8 %v331
    %v333 = vlaneseq
    %v334 = vshrl.u32 %v333, 7
    %v335 = vsub.s32 %v332, %v334
    %v336 = vrot.slane %v322, %v335
    %v337 = vcombine.low %v329, %v336
    %v339 = vunpack.c.l.s4 1983009808
    %v340 = vunpack.c.0.s8 %v339
    %v341 = vlaneseq
    %v342 = vshrl.u32 %v341, 7
    %v343 = vsub.s32 %v340, %v342
    %v344 = vrot.slane %v320, %v343
    %v347 = vmul.f32 %v249, %v337
    %v348 = vmul.f32 %v250, %v344
    %v349 = vsub.f32 %v298, %v347
    %v350 = vsub.f32 %v299, %v348
    %v351 = vadd.f32 %v230, %v349
    %v352 = vadd.f32 %v231, %v350
    %353 = vst [vmem:[#allocation9] sm:$0xff] %v351
    %354 = vst.msk [vmem:[#allocation9 + $0x8] sm:$0x3] %vm108, %v352
    %v355 = vmul.f32 %v247, %v337
    %v356 = vmul.f32 %v248, %v344
    %v357 = vmul.f32 %v249, %v288
    %v358 = vmul.f32 %v250, %v295
    %v359 = vadd.f32 %v355, %v357
    %v360 = vadd.f32 %v356, %v358
    %v361 = vadd.f32 %v236, %v359
    %v362 = vadd.f32 %v237, %v360
    %363 = vst [vmem:[#allocation10] sm:$0xff] %v361
    %364 = vst.msk [vmem:[#allocation10 + $0x8] sm:$0x3] %vm108, %v362
    // Predicated region
    $region42: #{tpu_custom_call.1} parent=1 // pred_check
      _
    $region43: #{tpu_custom_call.1} parent=1 // pred_check_branch
      %366 = sbr.rel (0) target = $region45
    $region44: #{tpu_custom_call.1} parent=1 // pred_region
      %s368 = ssub.s32 160, 160
      %369 = vsyncadd [#allocation6], %s368
      %s371 = sshll.u32 [#allocation9], 4
      %s372 = int_to_ptr.vmem [resolvable:$true] %s371
      %374 = dma.vmem_to_hbm [thread:$0]  %s372, 160, %s8, [#allocation6]
    $region45: #{tpu_custom_call.1} parent=1 // pred_fallthru
      _
    // Predicated region
    $region46: #{tpu_custom_call.1} parent=1 // pred_check
      _
    $region47: #{tpu_custom_call.1} parent=1 // pred_check_branch
      %376 = sbr.rel (0) target = $region49
    $region48: #{tpu_custom_call.1} parent=1 // pred_region
      %s378 = ssub.s32 160, 160
      %379 = vsyncadd [#allocation11], %s378
      %s381 = sshll.u32 [#allocation10], 4
      %s382 = int_to_ptr.vmem [resolvable:$true] %s381
      %384 = dma.vmem_to_hbm [thread:$0]  %s382, 160, %s9, [#allocation11]
    $region49: #{tpu_custom_call.1} parent=1 // pred_fallthru
      _
    // Predicated region
    $region50: #{tpu_custom_call.1} parent=1 // pred_check
      _
    $region51: #{tpu_custom_call.1} parent=1 // pred_check_branch
      %386 = sbr.rel (0) target = $region53
    $region52: #{tpu_custom_call.1} parent=1 // pred_region
      %387 = dma.done [#allocation6], 160
    $region53: #{tpu_custom_call.1} parent=1 // pred_fallthru
      _
    // Predicated region
    $region54: #{tpu_custom_call.1} parent=1 // pred_check
      _
    $region55: #{tpu_custom_call.1} parent=1 // pred_check_branch
      %389 = sbr.rel (0) target = $region57
    $region56: #{tpu_custom_call.1} parent=1 // pred_region
      %390 = dma.done [#allocation11], 160
    $region57: #{tpu_custom_call.1} parent=1 // pred_fallthru
      _
    %391 = vsyncpa [#allocation5], 1
    %392 = vsyncpa [#allocation8], 1
    %393 = vsyncpa [#allocation6], 1
    %394 = vsyncpa [#allocation11], 1

</llo_original>
